<compile_context>
chip_gen: v7x
topology: tpu7x:2x2x1
jax: 0.10.0
libtpu: 0.0.40
codegen_flags: <defaults>
</compile_context>

<pallas_src>
import functools

import jax
import jax.numpy as jnp
from jax.experimental import pallas as pl
from jax.experimental.pallas import tpu as pltpu

LANES = 128
CHUNK_ROWS = 1024          # in-kernel accumulation chunk (512 KiB f32 temporaries)


def _round_up(x, m):
    return ((x + m - 1) // m) * m


def _device_params():
    """(block_bytes_per_input, num_tensorcores) for the local device."""
    kind = ""
    try:
        kind = jax.devices()[0].device_kind.lower()
    except Exception:  # pragma: no cover - conservative fallback
        pass
    older = any(v in kind for v in ("v2", "v3", "v4", "v5"))
    block_bytes = (2 << 20) if older else (4 << 20)     # 2 MiB v5-; 4 MiB v6e/v7x
    ncores = 2 if ("v7" in kind or "tpu7" in kind) else 1
    return block_bytes, ncores


def _tile_partial(pred_ref, target_ref, *, chunk_rows, nchunks, masked, rows,
                  tile_row0):
    """Sum of squared diffs of this tile, folded to an (8, LANES) per-lane sum."""
    part = jnp.zeros((8, LANES), jnp.float32)
    if masked:
        # Precomputed row iota, compared per-chunk against (rows - chunk_row0).
        rid = jax.lax.broadcasted_iota(jnp.int32, (chunk_rows, LANES), 0)
    for k in range(nchunks):                      # static chunk loop
        r0 = k * chunk_rows                       # static slice start
        p = pred_ref[pl.ds(r0, chunk_rows), :].astype(jnp.float32)
        t = target_ref[pl.ds(r0, chunk_rows), :].astype(jnp.float32)
        d = t - p
        d2 = d * d
        if masked:
            lim = rows - (tile_row0 + r0)         # valid rows in this chunk
            d2 = jnp.where(rid < lim, d2, 0.0)
        # Pure VPU adds: fold (chunk_rows, 128) into the (8, 128) running sum.
        part = part + jnp.sum(d2.reshape(chunk_rows // 8, 8, LANES), axis=0)
    return part


def _epe_sumsq_kernel(pred_ref, target_ref, out_ref, acc_ref, *,
                      rows, tile_rows, chunk_rows, tiles_per_core, needs_mask):
    c = pl.program_id(0)
    i = pl.program_id(1)

    # Reset the per-lane accumulator at the start of each core's chunk.
    @pl.when(i == 0)
    def _():
        acc_ref[...] = jnp.zeros_like(acc_ref)

    nchunks = tile_rows // chunk_rows
    tile_row0 = (c * tiles_per_core + i) * tile_rows   # logical (unclamped) start

    if needs_mask:
        # Fast path for tiles fully inside the valid row range.
        @pl.when(tile_row0 + tile_rows <= rows)
        def _():
            acc_ref[...] += _tile_partial(
                pred_ref, target_ref, chunk_rows=chunk_rows, nchunks=nchunks,
                masked=False, rows=rows, tile_row0=tile_row0)

        # Masked path only for the ragged last tile / clamped duplicate tiles.
        # The mask zeroes the whole out-of-range contribution, so garbage
        # (even NaN/Inf) in padded or re-read regions cannot leak into the sum.
        @pl.when(tile_row0 + tile_rows > rows)
        def _():
            acc_ref[...] += _tile_partial(
                pred_ref, target_ref, chunk_rows=chunk_rows, nchunks=nchunks,
                masked=True, rows=rows, tile_row0=tile_row0)
    else:
        acc_ref[...] += _tile_partial(
            pred_ref, target_ref, chunk_rows=chunk_rows, nchunks=nchunks,
            masked=False, rows=rows, tile_row0=tile_row0)

    # One cross-lane reduce + scalar SMEM write per core, on its last step only.
    @pl.when(i == pl.num_programs(1) - 1)
    def _():
        out_ref[0, 0] = jnp.sum(acc_ref[...])


def epe_loss(pred: jax.Array, target: jax.Array) -> jax.Array:
    assert pred.shape == target.shape, "pred/target shape mismatch"
    n = pred.size
    p = pred.reshape(-1)
    t = target.reshape(-1)

    rows = n // LANES
    rem = n - rows * LANES

    # Lane tail (< 128 elements): negligible work, folded in at the end.
    if rem:
        dt = (t[rows * LANES:] - p[rows * LANES:]).astype(jnp.float32)
        tail_sq = jnp.sum(dt * dt)
    else:
        tail_sq = jnp.float32(0.0)

    if rows == 0:
        # Input smaller than a single 128-lane row; nothing for the kernel to do.
        return jnp.sqrt(tail_sq)

    # Bulk of the data as a lane-dense slab in the native dtype (no pad, no
    # upcast; the reshape is free when the size is a multiple of 128).
    p2d = p[:rows * LANES].reshape(rows, LANES)
    t2d = t[:rows * LANES].reshape(rows, LANES)

    itemsize = p2d.dtype.itemsize
    min_rows = max(8, 32 // max(1, itemsize))        # (sub, 128) packing granule
    block_bytes, ncores = _device_params()
    budget_rows = max(CHUNK_ROWS, block_bytes // (LANES * itemsize))

    if rows <= CHUNK_ROWS:
        tile_rows = _round_up(rows, min_rows)        # single small tile
    else:
        tile_rows = min(budget_rows, _round_up(rows, CHUNK_ROWS))
    chunk_rows = min(tile_rows, CHUNK_ROWS)

    row_tiles = pl.cdiv(rows, tile_rows)
    if row_tiles < 4:
        ncores = 1                                   # not worth sharding / duplicates
    if ncores > 1 and row_tiles % ncores != 0:
        # Try to shrink tile_rows so the tile count splits evenly across cores
        # (no clamped duplicate-tile DMAs).  Falls back to at most one
        # duplicate, fully-masked tile if the re-derivation doesn't land.
        tiles_total = _round_up(row_tiles, ncores)
        alt_tile_rows = _round_up(pl.cdiv(rows, tiles_total), CHUNK_ROWS)
        if pl.cdiv(rows, alt_tile_rows) == tiles_total:
            tile_rows, row_tiles = alt_tile_rows, tiles_total
            chunk_rows = min(tile_rows, CHUNK_ROWS)
    tiles_per_core = pl.cdiv(row_tiles, ncores)
    needs_mask = (ncores * tiles_per_core * tile_rows) != rows

    def in_index_map(c, i):
        # Clamp so the DMA never walks past the array; any duplicate / ragged
        # region is zeroed in-kernel via the gated row mask.
        return (jnp.minimum(c * tiles_per_core + i, row_tiles - 1), 0)

    kernel = functools.partial(
        _epe_sumsq_kernel,
        rows=rows,
        tile_rows=tile_rows,
        chunk_rows=chunk_rows,
        tiles_per_core=tiles_per_core,
        needs_mask=needs_mask,
    )

    partials = pl.pallas_call(
        kernel,
        out_shape=jax.ShapeDtypeStruct((ncores, 1), jnp.float32),
        grid_spec=pltpu.PrefetchScalarGridSpec(
            num_scalar_prefetch=0,
            grid=(ncores, tiles_per_core),
            in_specs=[
                pl.BlockSpec((tile_rows, LANES), in_index_map),
                pl.BlockSpec((tile_rows, LANES), in_index_map),
            ],
            out_specs=pl.BlockSpec((1, 1), lambda c, i: (c, 0),
                                   memory_space=pltpu.SMEM),
            scratch_shapes=[pltpu.VMEM((8, LANES), jnp.float32)],
        ),
        compiler_params=pltpu.CompilerParams(
            dimension_semantics=("parallel", "arbitrary"),
        ),
    )(p2d, t2d)

    # Combine per-core partial sums (+ lane tail) and take the sqrt.  The mean
    # of a 0-d tensor equals itself, matching the PyTorch module.
    return jnp.sqrt(jnp.sum(partials) + tail_sq)


if __name__ == "__main__":
    key = jax.random.PRNGKey(0)
    k1, k2, k3, k4 = jax.random.split(key, 4)

    # Flow-like tensors: batch=2, channels=2 (u,v), spatial 16x16 (NCHW).
    pred = jax.random.normal(k1, (2, 2, 16, 16), dtype=jnp.float32)
    target = jax.random.normal(k2, (2, 2, 16, 16), dtype=jnp.float32)
    loss = epe_loss(pred, target)
    jax.block_until_ready(loss)
    ref = jnp.sqrt(jnp.sum((target - pred) ** 2))
    assert jnp.allclose(loss, ref, rtol=1e-5, atol=1e-5), (loss, ref)

    # Ragged shape: exercises the masked last tile and the <128-lane tail.
    pred2 = jax.random.normal(k3, (3, 2, 17, 23), dtype=jnp.float32)
    target2 = jax.random.normal(k4, (3, 2, 17, 23), dtype=jnp.float32)
    loss2 = epe_loss(pred2, target2)
    jax.block_until_ready(loss2)
    ref2 = jnp.sqrt(jnp.sum((target2 - pred2) ** 2))
    assert jnp.allclose(loss2, ref2, rtol=1e-5, atol=1e-5), (loss2, ref2)

    print("KERNEL_OK")
</pallas_src>

<mosaic_0001>
module attributes {stable_mosaic.version = 11 : i64} {
  func.func @_epe_sumsq_kernel(%arg0: i32, %arg1: i32, %arg2: memref<8x128xf32, #tpu.memory_space<vmem>>, %arg3: memref<8x128xf32, #tpu.memory_space<vmem>>, %arg4: memref<1x1xf32, #tpu.memory_space<smem>>, %arg5: memref<8x128xf32, #tpu.memory_space<vmem>>) attributes {dimension_semantics = [#tpu.dimension_semantics<parallel>, #tpu.dimension_semantics<arbitrary>], iteration_bounds = array<i64: 1, 1>, scalar_prefetch = 0 : i64, scratch_operands = 1 : i64, tpu.core_type = #tpu.core_type<tc>, window_params = [{transform_indices = @transform_0, window_bounds = array<i64: 8, 128>}, {transform_indices = @transform_1, window_bounds = array<i64: 8, 128>}, {transform_indices = @transform_2, window_bounds = array<i64: 1, 1>}]} {
    %c0_i32 = arith.constant 0 : i32
    %0 = arith.cmpi eq, %arg1, %c0_i32 : i32
    %1 = arith.extui %0 : i1 to i32
    %c0_i32_0 = arith.constant 0 : i32
    %2 = arith.cmpi ne, %1, %c0_i32_0 : i32
    scf.if %2 {
      %cst_11 = arith.constant 0.000000e+00 : f32
      %17 = vector.broadcast %cst_11 : f32 to vector<8x128xf32>
      %c0_12 = arith.constant 0 : index
      %c0_13 = arith.constant 0 : index
      %18 = vector.load %arg5[%c0_12, %c0_13] : memref<8x128xf32, #tpu.memory_space<vmem>>, vector<8x128xf32>
      tpu.vector_store %arg5[%c0_12, %c0_13], %17 {strides = array<i32>} : memref<8x128xf32, #tpu.memory_space<vmem>>, vector<8x128xf32>,
    } else {
    }
    %c0 = arith.constant 0 : index
    %c0_1 = arith.constant 0 : index
    %3 = vector.load %arg5[%c0, %c0_1] : memref<8x128xf32, #tpu.memory_space<vmem>>, vector<8x128xf32>
    %cst = arith.constant 0.000000e+00 : f32
    %4 = vector.broadcast %cst : f32 to vector<8x128xf32>
    %c0_2 = arith.constant 0 : index
    %c0_3 = arith.constant 0 : index
    %5 = vector.load %arg2[%c0_2, %c0_3] : memref<8x128xf32, #tpu.memory_space<vmem>>, vector<8x128xf32>
    %c0_4 = arith.constant 0 : index
    %c0_5 = arith.constant 0 : index
    %6 = vector.load %arg3[%c0_4, %c0_5] : memref<8x128xf32, #tpu.memory_space<vmem>>, vector<8x128xf32>
    %7 = arith.subf %6, %5 : vector<8x128xf32>
    %8 = arith.mulf %7, %7 : vector<8x128xf32>
    %9 = vector.shape_cast %8 : vector<8x128xf32> to vector<1x8x128xf32>
    %cst_6 = arith.constant dense<0.000000e+00> : vector<8x128xf32>
    %10 = vector.multi_reduction <add>, %9, %cst_6 [0] : vector<1x8x128xf32> to vector<8x128xf32>
    %11 = arith.addf %4, %10 : vector<8x128xf32>
    %12 = arith.addf %3, %11 : vector<8x128xf32>
    %c0_7 = arith.constant 0 : index
    %c0_8 = arith.constant 0 : index
    %13 = vector.load %arg5[%c0_7, %c0_8] : memref<8x128xf32, #tpu.memory_space<vmem>>, vector<8x128xf32>
    tpu.vector_store %arg5[%c0_7, %c0_8], %12 {strides = array<i32>} : memref<8x128xf32, #tpu.memory_space<vmem>>, vector<8x128xf32>,
    %c0_i32_9 = arith.constant 0 : i32
    %14 = arith.cmpi eq, %arg1, %c0_i32_9 : i32
    %15 = arith.extui %14 : i1 to i32
    %c0_i32_10 = arith.constant 0 : i32
    %16 = arith.cmpi ne, %15, %c0_i32_10 : i32
    scf.if %16 {
      %c0_11 = arith.constant 0 : index
      %c0_12 = arith.constant 0 : index
      %17 = vector.load %arg5[%c0_11, %c0_12] : memref<8x128xf32, #tpu.memory_space<vmem>>, vector<8x128xf32>
      %18 = vector.shape_cast %17 : vector<8x128xf32> to vector<1x8x128xf32>
      %cst_13 = arith.constant dense<0.000000e+00> : vector<1xf32>
      %19 = vector.multi_reduction <add>, %18, %cst_13 [1, 2] : vector<1x8x128xf32> to vector<1xf32>
      %20 = vector.shape_cast %19 : vector<1xf32> to vector<1x1x1xf32>
      %21 = vector.extract %20[0, 0, 0] : f32 from vector<1x1x1xf32>
      %c0_14 = arith.constant 0 : index
      %c0_15 = arith.constant 0 : index
      %22 = memref.load %arg4[%c0_14, %c0_15] : memref<1x1xf32, #tpu.memory_space<smem>>
      memref.store %21, %arg4[%c0_14, %c0_15] : memref<1x1xf32, #tpu.memory_space<smem>>
    } else {
    }
    return
  }
  func.func @transform_0(%arg0: i32, %arg1: i32) -> (i32, i32) {
    %c1_i32 = arith.constant 1 : i32
    %0 = arith.muli %arg0, %c1_i32 : i32
    %1 = arith.addi %0, %arg1 : i32
    %c0_i32 = arith.constant 0 : i32
    %2 = arith.minsi %1, %c0_i32 : i32
    %c0_i32_0 = arith.constant 0 : i32
    %c0_i32_1 = arith.constant 0 : i32
    return %2, %c0_i32_0 : i32, i32
  }
  func.func @transform_1(%arg0: i32, %arg1: i32) -> (i32, i32) {
    %c1_i32 = arith.constant 1 : i32
    %0 = arith.muli %arg0, %c1_i32 : i32
    %1 = arith.addi %0, %arg1 : i32
    %c0_i32 = arith.constant 0 : i32
    %2 = arith.minsi %1, %c0_i32 : i32
    %c0_i32_0 = arith.constant 0 : i32
    %c0_i32_1 = arith.constant 0 : i32
    return %2, %c0_i32_0 : i32, i32
  }
  func.func @transform_2(%arg0: i32, %arg1: i32) -> (i32, i32) {
    %c0_i32 = arith.constant 0 : i32
    %c0_i32_0 = arith.constant 0 : i32
    return %arg0, %c0_i32 : i32, i32
  }
}

</mosaic_0001>

<llo_original>
// kernel: tpu_custom_call.1
$region0: #{tpu_custom_call.1}
  #allocation0 [shape = 'u32[]', space=smem, size = 0x4, offset = 0x4, fixed_abs, tag = 'smem constant byte address 0x4 - core index']
  #allocation1 [shape = 'u32[144,128]{1,0:T(1,128)}', space=vmem, size = 0x12000, scoped, tag = 'internal scratch']
  #allocation2 [shape = 'f32[8,128]{1,0:T(8,128)}', space=vmem, size = 0x1000, scoped, tag = 'scratch operand']
  %s0 = inlined_call_operand.hbm [shape: f32[8,128], index: 0, kind: input, shape index: {}]
  %s1 = inlined_call_operand.hbm [shape: f32[8,128], index: 1, kind: input, shape index: {}]
  %s2 = inlined_call_operand.hbm [shape: f32[1,1], index: 2, kind: output, shape index: {}]
  %s3 = sld [smem:[#allocation0]]
  $region34: #{tpu_custom_call.1} parent=0
    _
  %s5 = ssub.s32 1, %s3
  %s6 = scalar_select 0, %s5, %s3
  $region1: #{tpu_custom_call.1} parent=0
    #allocation3 [shape = 'u8[4096]{0}', space=vmem, size = 0x1000, scoped, tag = 'input window, operand 0, single buffered']
    #allocation4 [shape = 's32[1]{0}', space=sflag, size = 0x4, scoped, tag = 'scoped memory for tpu_custom_call.1']
    #allocation5 [shape = 's32[1]{0}', space=sflag, size = 0x4, scoped, tag = 'scoped memory for tpu_custom_call.1']
    #allocation6 [shape = 'u8[4096]{0}', space=vmem, size = 0x1000, scoped, tag = 'input window, operand 1, single buffered']
    #allocation7 [shape = 's32[1]{0}', space=sflag, size = 0x4, scoped, tag = 'scoped memory for tpu_custom_call.1']
    #allocation8 [shape = 'u8[512]{0}', space=smem, size = 0x200, scoped, tag = 'output window, operand 0, single buffered']
    %7 = vsyncpa [#allocation4], 0
    %8 = vsyncpa [#allocation7], 0
    %9 = vsyncpa [#allocation5], 0
    // Predicated region
    $region2: #{tpu_custom_call.1} parent=1 // pred_check
      _
    $region3: #{tpu_custom_call.1} parent=1 // pred_check_branch
      %11 = sbr.rel (0) target = $region5
    $region4: #{tpu_custom_call.1} parent=1 // pred_region
      %s12 = sadd.s32 0, 0
      %p13 = scmp.lt.s32.totalorder %s12, 0
      %s14 = scalar_select %p13, %s12, 0
      %s16 = ssub.s32 128, 128
      %17 = vsyncadd [#allocation4], %s16
      %s18 = smul.addr %s14, 128
      %s19 = scalar_lea.hbm %s0, %s18
      %s21 = sshll.u32 [#allocation3], 4
      %s22 = int_to_ptr.vmem [resolvable:$true] %s21
      %24 = dma.hbm_to_vmem [thread:$0]  %s19, 128, %s22, [#allocation4]
    $region5: #{tpu_custom_call.1} parent=1 // pred_fallthru
      _
    // Predicated region
    $region6: #{tpu_custom_call.1} parent=1 // pred_check
      _
    $region7: #{tpu_custom_call.1} parent=1 // pred_check_branch
      %26 = sbr.rel (0) target = $region9
    $region8: #{tpu_custom_call.1} parent=1 // pred_region
      %s27 = sadd.s32 0, 0
      %p28 = scmp.lt.s32.totalorder %s27, 0
      %s29 = scalar_select %p28, %s27, 0
      %s31 = ssub.s32 128, 128
      %32 = vsyncadd [#allocation7], %s31
      %s33 = smul.addr %s29, 128
      %s34 = scalar_lea.hbm %s1, %s33
      %s36 = sshll.u32 [#allocation6], 4
      %s37 = int_to_ptr.vmem [resolvable:$true] %s36
      %39 = dma.hbm_to_vmem [thread:$0]  %s34, 128, %s37, [#allocation7]
    $region9: #{tpu_custom_call.1} parent=1 // pred_fallthru
      _
    // Predicated region
    $region10: #{tpu_custom_call.1} parent=1 // pred_check
      _
    $region11: #{tpu_custom_call.1} parent=1 // pred_check_branch
      %41 = sbr.rel (0) target = $region13
    $region12: #{tpu_custom_call.1} parent=1 // pred_region
      %42 = dma.done [#allocation4], 128
    $region13: #{tpu_custom_call.1} parent=1 // pred_fallthru
      _
    // Predicated region
    $region14: #{tpu_custom_call.1} parent=1 // pred_check
      _
    $region15: #{tpu_custom_call.1} parent=1 // pred_check_branch
      %44 = sbr.rel (0) target = $region17
    $region16: #{tpu_custom_call.1} parent=1 // pred_region
      %45 = dma.done [#allocation7], 128
    $region17: #{tpu_custom_call.1} parent=1 // pred_fallthru
      _
    %s46 = sadd.s32 0, 0
    %p47 = scmp.lt.s32.totalorder %s46, 0
    %s48 = scalar_select %p47, %s46, 0
    %s49 = sadd.s32 0, 0
    %p50 = scmp.lt.s32.totalorder %s49, 0
    %s51 = scalar_select %p50, %s49, 0
    %p52 = scmp.eq.s32.totalorder 0, 0
    // Predicated region
    $region18: #{tpu_custom_call.1} parent=1 // pred_check
      %p53 = pneg %p52
    $region19: #{tpu_custom_call.1} parent=1 // pred_check_branch
      %55 = sbr.rel (%p53) target = $region21
    $region20: #{tpu_custom_call.1} parent=1 // pred_region
      %56 = vst [vmem:[#allocation2] sm:$0xff] 0.0
    $region21: #{tpu_custom_call.1} parent=1 // pred_fallthru
      _
    %v57 = vld [vmem:[#allocation2] sm:$0xff]
    %v58 = vld [vmem:[#allocation3] sm:$0xff]
    %v59 = vld [vmem:[#allocation6] sm:$0xff]
    %v60 = vsub.f32 %v59, %v58
    %v61 = vmul.f32 %v60, %v60
    %v62 = vadd.f32 %v61, 0.0
    %v63 = vadd.f32 %v62, 0.0
    %v64 = vadd.f32 %v57, %v63
    %65 = vst [vmem:[#allocation2] sm:$0xff] %v64
    // Predicated region
    $region22: #{tpu_custom_call.1} parent=1 // pred_check
      %p66 = pneg %p52
    $region23: #{tpu_custom_call.1} parent=1 // pred_check_branch
      %68 = sbr.rel (%p66) target = $region25
    $region24: #{tpu_custom_call.1} parent=1 // pred_region
      %v69 = vld [vmem:[#allocation2] sm:$0xff]
      %70 = vadd.xlane.f32.xlu0 %v69
      %v71 = vpop.xlane.xlu0 %70
      %v72 = vrot.slane %v71, 4
      %v73 = vadd.f32 %v71, %v72
      %v74 = vrot.slane %v73, 2
      %v75 = vadd.f32 %v73, %v74
      %v76 = vrot.slane %v75, 1
      %v77 = vadd.f32 %v75, %v76
      %s78 = vtos %v77
      %s79 = scalar_lea.smem [#allocation8], 0
      %80 = sst [smem:[%s79]] %s78
    $region25: #{tpu_custom_call.1} parent=1 // pred_fallthru
      _
    // Predicated region
    $region26: #{tpu_custom_call.1} parent=1 // pred_check
      _
    $region27: #{tpu_custom_call.1} parent=1 // pred_check_branch
      %82 = sbr.rel (0) target = $region29
    $region28: #{tpu_custom_call.1} parent=1 // pred_region
      %s84 = ssub.s32 16, 16
      %85 = vsyncadd [#allocation5], %s84
      %88 = dma.smem_to_hbm [#allocation8], 16, %s2, [#allocation5]
    $region29: #{tpu_custom_call.1} parent=1 // pred_fallthru
      _
    // Predicated region
    $region30: #{tpu_custom_call.1} parent=1 // pred_check
      _
    $region31: #{tpu_custom_call.1} parent=1 // pred_check_branch
      %90 = sbr.rel (0) target = $region33
    $region32: #{tpu_custom_call.1} parent=1 // pred_region
      %91 = dma.done [#allocation5], 16
    $region33: #{tpu_custom_call.1} parent=1 // pred_fallthru
      _
    %92 = sfence
    %93 = vsyncpa [#allocation4], 1
    %94 = vsyncpa [#allocation7], 1
    %95 = vsyncpa [#allocation5], 1

</llo_original>
